<compile_context>
chip_gen: v7x
topology: tpu7x:2x2x1
jax: 0.10.0
libtpu: 0.0.40
codegen_flags: <defaults>
</compile_context>

<pallas_src>
import functools

import numpy as np
import jax
import jax.numpy as jnp
from jax import lax
from jax.experimental import pallas as pl
from jax.experimental.pallas import tpu as pltpu


# ----------------------------- Pallas kernel --------------------------------
def _basic_block_kernel(x_ref, w1_ref, b1_ref, w2_ref, b2_ref, m_ref, o_ref,
                        slab_ref, *, width):
    """Fully fused BasicBlock for one image, flattened-spatial (lane-dense) layout.

    x_ref   : (C, H*W)        f32   image; channels on sublanes, flat spatial on lanes
    w1_ref  : (Cout, 9*C)     bf16  conv1 weight, 9 taps folded into K, bn1 scale folded in
    b1_ref  : (Cout, 1)       f32   folded bn1 bias
    w2_ref  : (Cout, 9*Cout)  bf16  conv2 weight (bn2 scale folded in)
    b2_ref  : (Cout, 1)       f32   folded bn2 bias
    m_ref   : (9, H*W)        f32   per-tap validity masks (implements the zero padding)
    o_ref   : (Cout, H*W)     f32   block output
    slab_ref: (9*C, H*W)      f32   VMEM scratch: im2col patch slab (reused by both convs)
    """
    hw = x_ref.shape[1]
    x = x_ref[...]                       # (C, HW) f32 -- also the residual identity
    masks = m_ref[...]                   # (9, HW) f32

    def conv3x3(act, w_ref):
        """act: (Cin, HW) f32  ->  (Cout, HW) f32 via ONE bf16 MXU dot with K = 9*Cin."""
        cin = act.shape[0]
        for kh in range(3):
            for kw in range(3):
                tap = kh * 3 + kw
                # Lane p of the shifted copy holds act[p + s], s = (kh-1)*W + (kw-1).
                shift = (-((kh - 1) * width + (kw - 1))) % hw
                shifted = pltpu.roll(act, shift, axis=1) if shift else act
                # The mask zeroes lanes whose neighbour fell outside the image (== zero padding).
                slab_ref[tap * cin:(tap + 1) * cin, :] = shifted * masks[tap:tap + 1, :]
        slab = slab_ref[...].astype(jnp.bfloat16)        # (9*Cin, HW) bf16 MXU operand
        return jnp.dot(w_ref[...], slab, preferred_element_type=jnp.float32)

    # conv1 -> bn1 (folded) -> relu      (activation never leaves VMEM / vregs)
    h1 = jnp.maximum(conv3x3(x, w1_ref) + b1_ref[...], 0.0)
    # conv2 -> bn2 (folded) -> + identity -> relu   (f32 epilogue)
    out = conv3x3(h1, w2_ref) + b2_ref[...] + x
    o_ref[...] = jnp.maximum(out, 0.0)


def fused_basic_block(x_flat, w1, b1, w2, b2, masks, *, width):
    """x_flat: (N, C, H*W) f32; w*: (Cout, 9*Cin) bf16; b*: (Cout, 1) f32; masks: (9, H*W) f32."""
    n, c, hw = x_flat.shape
    cout = w1.shape[0]
    grid_spec = pltpu.PrefetchScalarGridSpec(
        num_scalar_prefetch=0,
        grid=(n,),                                                   # one image per step
        in_specs=[
            pl.BlockSpec((None, c, hw), lambda i: (i, 0, 0)),        # image tile (lane-dense H*W)
            pl.BlockSpec((cout, 9 * c), lambda i: (0, 0)),           # w1 (resident)
            pl.BlockSpec((cout, 1), lambda i: (0, 0)),               # bn1 bias
            pl.BlockSpec((cout, 9 * cout), lambda i: (0, 0)),        # w2 (resident)
            pl.BlockSpec((cout, 1), lambda i: (0, 0)),               # bn2 bias
            pl.BlockSpec((9, hw), lambda i: (0, 0)),                 # tap masks (resident)
        ],
        out_specs=pl.BlockSpec((None, cout, hw), lambda i: (i, 0, 0)),
        scratch_shapes=[pltpu.VMEM((9 * c, hw), jnp.float32)],       # im2col slab (C == Cout)
    )
    return pl.pallas_call(
        functools.partial(_basic_block_kernel, width=width),
        out_shape=jax.ShapeDtypeStruct((n, cout, hw), jnp.float32),
        grid_spec=grid_spec,
        compiler_params=pltpu.CompilerParams(dimension_semantics=("parallel",)),
    )(x_flat, w1, b1, w2, b2, masks)


# ------------------------------ JAX glue -------------------------------------
def _fold_bn(gamma, beta, mean, var, eps=1e-5):
    scale = gamma / jnp.sqrt(var + eps)
    return scale, beta - mean * scale


def _fold_conv_weight(w_oihw, scale):
    """PyTorch (O, I, 3, 3) conv weight -> (O, 9*I) bf16, BN scale folded into output rows.

    Column order is tap-major ((kh*3 + kw)*I + i) to match the slab built in the kernel."""
    o, i = w_oihw.shape[0], w_oihw.shape[1]
    wmat = jnp.transpose(w_oihw, (0, 2, 3, 1)).reshape(o, 9 * i)
    return (wmat * scale[:, None]).astype(jnp.bfloat16)


def _tap_masks(H, W):
    """(9, H*W) f32 masks: mask[kh*3+kw, h*W+w] = 1 iff (h+kh-1, w+kw-1) is inside the image."""
    hh, ww = np.meshgrid(np.arange(H), np.arange(W), indexing="ij")
    rows = []
    for kh in range(3):
        for kw in range(3):
            valid = ((hh + kh - 1 >= 0) & (hh + kh - 1 < H) &
                     (ww + kw - 1 >= 0) & (ww + kw - 1 < W))
            rows.append(valid.reshape(-1))
    return jnp.asarray(np.stack(rows), dtype=jnp.float32)


def basic_block_forward(x_nchw, params):
    """BasicBlock(stride=1, downsample=None) forward. Input/output are NCHW."""
    n, c, h, w = x_nchw.shape
    cout = params["w1"].shape[0]
    assert cout == c and params["w2"].shape[0] == cout, "no-downsample path requires C == Cout"

    s1, b1 = _fold_bn(params["g1"], params["b1"], params["m1"], params["v1"])
    s2, b2 = _fold_bn(params["g2"], params["b2"], params["m2"], params["v2"])
    w1 = _fold_conv_weight(params["w1"], s1)
    w2 = _fold_conv_weight(params["w2"], s2)
    masks = _tap_masks(h, w)

    # Contiguous reshape only -- no pad / no transpose of the activation in HBM.
    x_flat = x_nchw.reshape(n, c, h * w).astype(jnp.float32)
    out = fused_basic_block(x_flat, w1, b1.reshape(-1, 1), w2, b2.reshape(-1, 1),
                            masks, width=w)
    return out.reshape(n, cout, h, w)


# ----------------------- pure-JAX reference (for checking) -------------------
def _ref_forward(x_nchw, params, eps=1e-5):
    def conv3x3(x, w):
        return lax.conv_general_dilated(
            x, w, window_strides=(1, 1), padding=((1, 1), (1, 1)),
            dimension_numbers=("NCHW", "OIHW", "NCHW"),
            precision=lax.Precision.HIGHEST)

    def bn(x, g, b, m, v):
        g, b, m, v = (a.reshape(1, -1, 1, 1) for a in (g, b, m, v))
        return (x - m) / jnp.sqrt(v + eps) * g + b

    out = jnp.maximum(bn(conv3x3(x_nchw, params["w1"]),
                         params["g1"], params["b1"], params["m1"], params["v1"]), 0.0)
    out = bn(conv3x3(out, params["w2"]),
             params["g2"], params["b2"], params["m2"], params["v2"])
    return jnp.maximum(out + x_nchw, 0.0)


# --------------------------------- main --------------------------------------
if __name__ == "__main__":
    N, C, H, W = 2, 4, 16, 16          # inplanes == planes == 4, stride=1
    key = jax.random.PRNGKey(0)
    ks = jax.random.split(key, 11)

    params = {
        "w1": 0.1 * jax.random.normal(ks[0], (C, C, 3, 3), jnp.float32),
        "g1": 1.0 + 0.1 * jax.random.normal(ks[1], (C,), jnp.float32),
        "b1": 0.1 * jax.random.normal(ks[2], (C,), jnp.float32),
        "m1": 0.05 * jax.random.normal(ks[3], (C,), jnp.float32),
        "v1": jax.random.uniform(ks[4], (C,), jnp.float32, 0.5, 1.5),
        "w2": 0.1 * jax.random.normal(ks[5], (C, C, 3, 3), jnp.float32),
        "g2": 1.0 + 0.1 * jax.random.normal(ks[6], (C,), jnp.float32),
        "b2": 0.1 * jax.random.normal(ks[7], (C,), jnp.float32),
        "m2": 0.05 * jax.random.normal(ks[8], (C,), jnp.float32),
        "v2": jax.random.uniform(ks[9], (C,), jnp.float32, 0.5, 1.5),
    }
    x = jax.random.normal(ks[10], (N, C, H, W), jnp.float32)

    fwd = jax.jit(functools.partial(basic_block_forward, params=params))
    out = jax.block_until_ready(fwd(x))

    ref = jax.block_until_ready(_ref_forward(x, params))
    # bf16 MXU operands with f32 accumulation -> slightly looser tolerance than pure f32.
    np.testing.assert_allclose(np.asarray(out), np.asarray(ref), atol=2e-2, rtol=2e-2)

    print("KERNEL_OK")
</pallas_src>

<mosaic_0001>
module attributes {stable_mosaic.version = 11 : i64} {
  func.func @_basic_block_kernel(%arg0: i32, %arg1: memref<1x4x256xf32, #tpu.memory_space<vmem>>, %arg2: memref<4x36xbf16, #tpu.memory_space<vmem>>, %arg3: memref<4x1xf32, #tpu.memory_space<vmem>>, %arg4: memref<4x36xbf16, #tpu.memory_space<vmem>>, %arg5: memref<4x1xf32, #tpu.memory_space<vmem>>, %arg6: memref<9x256xf32, #tpu.memory_space<vmem>>, %arg7: memref<1x4x256xf32, #tpu.memory_space<vmem>>, %arg8: memref<36x256xf32, #tpu.memory_space<vmem>>) attributes {dimension_semantics = [#tpu.dimension_semantics<parallel>], iteration_bounds = array<i64: 2>, scalar_prefetch = 0 : i64, scratch_operands = 1 : i64, tpu.core_type = #tpu.core_type<tc>, window_params = [{transform_indices = @transform_0, window_bounds = array<i64: 1, 4, 256>}, {pipeline_mode = #tpu.pipeline_mode<synchronous>, transform_indices = @transform_1, window_bounds = array<i64: 4, 36>}, {pipeline_mode = #tpu.pipeline_mode<synchronous>, transform_indices = @transform_2, window_bounds = array<i64: 4, 1>}, {pipeline_mode = #tpu.pipeline_mode<synchronous>, transform_indices = @transform_3, window_bounds = array<i64: 4, 36>}, {pipeline_mode = #tpu.pipeline_mode<synchronous>, transform_indices = @transform_4, window_bounds = array<i64: 4, 1>}, {pipeline_mode = #tpu.pipeline_mode<synchronous>, transform_indices = @transform_5, window_bounds = array<i64: 9, 256>}, {transform_indices = @transform_6, window_bounds = array<i64: 1, 4, 256>}]} {
    %c0 = arith.constant 0 : index
    %c0_0 = arith.constant 0 : index
    %c0_1 = arith.constant 0 : index
    %0 = vector.load %arg1[%c0, %c0_0, %c0_1] : memref<1x4x256xf32, #tpu.memory_space<vmem>>, vector<1x4x256xf32>
    %1 = vector.shape_cast %0 : vector<1x4x256xf32> to vector<4x256xf32>
    %c0_2 = arith.constant 0 : index
    %c0_3 = arith.constant 0 : index
    %2 = vector.load %arg6[%c0_2, %c0_3] : memref<9x256xf32, #tpu.memory_space<vmem>>, vector<9x256xf32>
    %c17_i32 = arith.constant 17 : i32
    %3 = tpu.dynamic_rotate %1 by %c17_i32 dim 1 : vector<4x256xf32>, i32 -> vector<4x256xf32>
    %4 = vector.extract_strided_slice %2 {offsets = [0, 0], sizes = [1, 256], strides = [1, 1]} : vector<9x256xf32> to vector<1x256xf32>
    %5 = vector.broadcast %4 : vector<1x256xf32> to vector<4x256xf32>
    %6 = arith.mulf %3, %5 : vector<4x256xf32>
    %c0_4 = arith.constant 0 : index
    %c0_5 = arith.constant 0 : index
    %7 = vector.load %arg8[%c0_4, %c0_5] : memref<36x256xf32, #tpu.memory_space<vmem>>, vector<4x256xf32>
    tpu.vector_store %arg8[%c0_4, %c0_5], %6 {strides = array<i32>} : memref<36x256xf32, #tpu.memory_space<vmem>>, vector<4x256xf32>,
    %c16_i32 = arith.constant 16 : i32
    %8 = tpu.dynamic_rotate %1 by %c16_i32 dim 1 : vector<4x256xf32>, i32 -> vector<4x256xf32>
    %9 = vector.extract_strided_slice %2 {offsets = [1, 0], sizes = [1, 256], strides = [1, 1]} : vector<9x256xf32> to vector<1x256xf32>
    %10 = vector.broadcast %9 : vector<1x256xf32> to vector<4x256xf32>
    %11 = arith.mulf %8, %10 : vector<4x256xf32>
    %c4 = arith.constant 4 : index
    %c0_6 = arith.constant 0 : index
    %12 = vector.load %arg8[%c4, %c0_6] : memref<36x256xf32, #tpu.memory_space<vmem>>, vector<4x256xf32>
    tpu.vector_store %arg8[%c4, %c0_6], %11 {strides = array<i32>} : memref<36x256xf32, #tpu.memory_space<vmem>>, vector<4x256xf32>,
    %c15_i32 = arith.constant 15 : i32
    %13 = tpu.dynamic_rotate %1 by %c15_i32 dim 1 : vector<4x256xf32>, i32 -> vector<4x256xf32>
    %14 = vector.extract_strided_slice %2 {offsets = [2, 0], sizes = [1, 256], strides = [1, 1]} : vector<9x256xf32> to vector<1x256xf32>
    %15 = vector.broadcast %14 : vector<1x256xf32> to vector<4x256xf32>
    %16 = arith.mulf %13, %15 : vector<4x256xf32>
    %c8 = arith.constant 8 : index
    %c0_7 = arith.constant 0 : index
    %17 = vector.load %arg8[%c8, %c0_7] : memref<36x256xf32, #tpu.memory_space<vmem>>, vector<4x256xf32>
    tpu.vector_store %arg8[%c8, %c0_7], %16 {strides = array<i32>} : memref<36x256xf32, #tpu.memory_space<vmem>>, vector<4x256xf32>,
    %c1_i32 = arith.constant 1 : i32
    %18 = tpu.dynamic_rotate %1 by %c1_i32 dim 1 : vector<4x256xf32>, i32 -> vector<4x256xf32>
    %19 = vector.extract_strided_slice %2 {offsets = [3, 0], sizes = [1, 256], strides = [1, 1]} : vector<9x256xf32> to vector<1x256xf32>
    %20 = vector.broadcast %19 : vector<1x256xf32> to vector<4x256xf32>
    %21 = arith.mulf %18, %20 : vector<4x256xf32>
    %c12 = arith.constant 12 : index
    %c0_8 = arith.constant 0 : index
    %22 = vector.load %arg8[%c12, %c0_8] : memref<36x256xf32, #tpu.memory_space<vmem>>, vector<4x256xf32>
    tpu.vector_store %arg8[%c12, %c0_8], %21 {strides = array<i32>} : memref<36x256xf32, #tpu.memory_space<vmem>>, vector<4x256xf32>,
    %23 = vector.extract_strided_slice %2 {offsets = [4, 0], sizes = [1, 256], strides = [1, 1]} : vector<9x256xf32> to vector<1x256xf32>
    %24 = vector.broadcast %23 : vector<1x256xf32> to vector<4x256xf32>
    %25 = arith.mulf %1, %24 : vector<4x256xf32>
    %c16 = arith.constant 16 : index
    %c0_9 = arith.constant 0 : index
    %26 = vector.load %arg8[%c16, %c0_9] : memref<36x256xf32, #tpu.memory_space<vmem>>, vector<4x256xf32>
    tpu.vector_store %arg8[%c16, %c0_9], %25 {strides = array<i32>} : memref<36x256xf32, #tpu.memory_space<vmem>>, vector<4x256xf32>,
    %c255_i32 = arith.constant 255 : i32
    %27 = tpu.dynamic_rotate %1 by %c255_i32 dim 1 : vector<4x256xf32>, i32 -> vector<4x256xf32>
    %28 = vector.extract_strided_slice %2 {offsets = [5, 0], sizes = [1, 256], strides = [1, 1]} : vector<9x256xf32> to vector<1x256xf32>
    %29 = vector.broadcast %28 : vector<1x256xf32> to vector<4x256xf32>
    %30 = arith.mulf %27, %29 : vector<4x256xf32>
    %c20 = arith.constant 20 : index
    %c0_10 = arith.constant 0 : index
    %31 = vector.load %arg8[%c20, %c0_10] : memref<36x256xf32, #tpu.memory_space<vmem>>, vector<4x256xf32>
    tpu.vector_store %arg8[%c20, %c0_10], %30 {strides = array<i32>} : memref<36x256xf32, #tpu.memory_space<vmem>>, vector<4x256xf32>,
    %c241_i32 = arith.constant 241 : i32
    %32 = tpu.dynamic_rotate %1 by %c241_i32 dim 1 : vector<4x256xf32>, i32 -> vector<4x256xf32>
    %33 = vector.extract_strided_slice %2 {offsets = [6, 0], sizes = [1, 256], strides = [1, 1]} : vector<9x256xf32> to vector<1x256xf32>
    %34 = vector.broadcast %33 : vector<1x256xf32> to vector<4x256xf32>
    %35 = arith.mulf %32, %34 : vector<4x256xf32>
    %c24 = arith.constant 24 : index
    %c0_11 = arith.constant 0 : index
    %36 = vector.load %arg8[%c24, %c0_11] : memref<36x256xf32, #tpu.memory_space<vmem>>, vector<4x256xf32>
    tpu.vector_store %arg8[%c24, %c0_11], %35 {strides = array<i32>} : memref<36x256xf32, #tpu.memory_space<vmem>>, vector<4x256xf32>,
    %c240_i32 = arith.constant 240 : i32
    %37 = tpu.dynamic_rotate %1 by %c240_i32 dim 1 : vector<4x256xf32>, i32 -> vector<4x256xf32>
    %38 = vector.extract_strided_slice %2 {offsets = [7, 0], sizes = [1, 256], strides = [1, 1]} : vector<9x256xf32> to vector<1x256xf32>
    %39 = vector.broadcast %38 : vector<1x256xf32> to vector<4x256xf32>
    %40 = arith.mulf %37, %39 : vector<4x256xf32>
    %c28 = arith.constant 28 : index
    %c0_12 = arith.constant 0 : index
    %41 = vector.load %arg8[%c28, %c0_12] : memref<36x256xf32, #tpu.memory_space<vmem>>, vector<4x256xf32>
    tpu.vector_store %arg8[%c28, %c0_12], %40 {strides = array<i32>} : memref<36x256xf32, #tpu.memory_space<vmem>>, vector<4x256xf32>,
    %c239_i32 = arith.constant 239 : i32
    %42 = tpu.dynamic_rotate %1 by %c239_i32 dim 1 : vector<4x256xf32>, i32 -> vector<4x256xf32>
    %43 = vector.extract_strided_slice %2 {offsets = [8, 0], sizes = [1, 256], strides = [1, 1]} : vector<9x256xf32> to vector<1x256xf32>
    %44 = vector.broadcast %43 : vector<1x256xf32> to vector<4x256xf32>
    %45 = arith.mulf %42, %44 : vector<4x256xf32>
    %c32 = arith.constant 32 : index
    %c0_13 = arith.constant 0 : index
    %46 = vector.load %arg8[%c32, %c0_13] : memref<36x256xf32, #tpu.memory_space<vmem>>, vector<4x256xf32>
    tpu.vector_store %arg8[%c32, %c0_13], %45 {strides = array<i32>} : memref<36x256xf32, #tpu.memory_space<vmem>>, vector<4x256xf32>,
    %c0_14 = arith.constant 0 : index
    %c0_15 = arith.constant 0 : index
    %47 = vector.load %arg8[%c0_14, %c0_15] : memref<36x256xf32, #tpu.memory_space<vmem>>, vector<36x256xf32>
    %48 = arith.truncf %47 : vector<36x256xf32> to vector<36x256xbf16>
    %c0_16 = arith.constant 0 : index
    %c0_17 = arith.constant 0 : index
    %49 = vector.load %arg2[%c0_16, %c0_17] : memref<4x36xbf16, #tpu.memory_space<vmem>>, vector<4x36xbf16>
    %cst = arith.constant dense<0.000000e+00> : vector<4x256xf32>
    %50 = tpu.matmul %49, %48, %cst {dimension_numbers = #tpu.dot_dimension_numbers<[1], [0], [0], [1], [0, 0, 1, 1], [], []>} : vector<4x36xbf16>, vector<36x256xbf16>, vector<4x256xf32> -> vector<4x256xf32>
    %c0_18 = arith.constant 0 : index
    %c0_19 = arith.constant 0 : index
    %51 = vector.load %arg3[%c0_18, %c0_19] : memref<4x1xf32, #tpu.memory_space<vmem>>, vector<4x1xf32>
    %52 = vector.broadcast %51 : vector<4x1xf32> to vector<4x256xf32>
    %53 = arith.addf %50, %52 : vector<4x256xf32>
    %cst_20 = arith.constant 0.000000e+00 : f32
    %54 = vector.broadcast %cst_20 : f32 to vector<4x256xf32>
    %55 = arith.maximumf %53, %54 : vector<4x256xf32>
    %c17_i32_21 = arith.constant 17 : i32
    %56 = tpu.dynamic_rotate %55 by %c17_i32_21 dim 1 : vector<4x256xf32>, i32 -> vector<4x256xf32>
    %57 = vector.extract_strided_slice %2 {offsets = [0, 0], sizes = [1, 256], strides = [1, 1]} : vector<9x256xf32> to vector<1x256xf32>
    %58 = vector.broadcast %57 : vector<1x256xf32> to vector<4x256xf32>
    %59 = arith.mulf %56, %58 : vector<4x256xf32>
    %c0_22 = arith.constant 0 : index
    %c0_23 = arith.constant 0 : index
    %60 = vector.load %arg8[%c0_22, %c0_23] : memref<36x256xf32, #tpu.memory_space<vmem>>, vector<4x256xf32>
    tpu.vector_store %arg8[%c0_22, %c0_23], %59 {strides = array<i32>} : memref<36x256xf32, #tpu.memory_space<vmem>>, vector<4x256xf32>,
    %c16_i32_24 = arith.constant 16 : i32
    %61 = tpu.dynamic_rotate %55 by %c16_i32_24 dim 1 : vector<4x256xf32>, i32 -> vector<4x256xf32>
    %62 = vector.extract_strided_slice %2 {offsets = [1, 0], sizes = [1, 256], strides = [1, 1]} : vector<9x256xf32> to vector<1x256xf32>
    %63 = vector.broadcast %62 : vector<1x256xf32> to vector<4x256xf32>
    %64 = arith.mulf %61, %63 : vector<4x256xf32>
    %c4_25 = arith.constant 4 : index
    %c0_26 = arith.constant 0 : index
    %65 = vector.load %arg8[%c4_25, %c0_26] : memref<36x256xf32, #tpu.memory_space<vmem>>, vector<4x256xf32>
    tpu.vector_store %arg8[%c4_25, %c0_26], %64 {strides = array<i32>} : memref<36x256xf32, #tpu.memory_space<vmem>>, vector<4x256xf32>,
    %c15_i32_27 = arith.constant 15 : i32
    %66 = tpu.dynamic_rotate %55 by %c15_i32_27 dim 1 : vector<4x256xf32>, i32 -> vector<4x256xf32>
    %67 = vector.extract_strided_slice %2 {offsets = [2, 0], sizes = [1, 256], strides = [1, 1]} : vector<9x256xf32> to vector<1x256xf32>
    %68 = vector.broadcast %67 : vector<1x256xf32> to vector<4x256xf32>
    %69 = arith.mulf %66, %68 : vector<4x256xf32>
    %c8_28 = arith.constant 8 : index
    %c0_29 = arith.constant 0 : index
    %70 = vector.load %arg8[%c8_28, %c0_29] : memref<36x256xf32, #tpu.memory_space<vmem>>, vector<4x256xf32>
    tpu.vector_store %arg8[%c8_28, %c0_29], %69 {strides = array<i32>} : memref<36x256xf32, #tpu.memory_space<vmem>>, vector<4x256xf32>,
    %c1_i32_30 = arith.constant 1 : i32
    %71 = tpu.dynamic_rotate %55 by %c1_i32_30 dim 1 : vector<4x256xf32>, i32 -> vector<4x256xf32>
    %72 = vector.extract_strided_slice %2 {offsets = [3, 0], sizes = [1, 256], strides = [1, 1]} : vector<9x256xf32> to vector<1x256xf32>
    %73 = vector.broadcast %72 : vector<1x256xf32> to vector<4x256xf32>
    %74 = arith.mulf %71, %73 : vector<4x256xf32>
    %c12_31 = arith.constant 12 : index
    %c0_32 = arith.constant 0 : index
    %75 = vector.load %arg8[%c12_31, %c0_32] : memref<36x256xf32, #tpu.memory_space<vmem>>, vector<4x256xf32>
    tpu.vector_store %arg8[%c12_31, %c0_32], %74 {strides = array<i32>} : memref<36x256xf32, #tpu.memory_space<vmem>>, vector<4x256xf32>,
    %76 = vector.extract_strided_slice %2 {offsets = [4, 0], sizes = [1, 256], strides = [1, 1]} : vector<9x256xf32> to vector<1x256xf32>
    %77 = vector.broadcast %76 : vector<1x256xf32> to vector<4x256xf32>
    %78 = arith.mulf %55, %77 : vector<4x256xf32>
    %c16_33 = arith.constant 16 : index
    %c0_34 = arith.constant 0 : index
    %79 = vector.load %arg8[%c16_33, %c0_34] : memref<36x256xf32, #tpu.memory_space<vmem>>, vector<4x256xf32>
    tpu.vector_store %arg8[%c16_33, %c0_34], %78 {strides = array<i32>} : memref<36x256xf32, #tpu.memory_space<vmem>>, vector<4x256xf32>,
    %c255_i32_35 = arith.constant 255 : i32
    %80 = tpu.dynamic_rotate %55 by %c255_i32_35 dim 1 : vector<4x256xf32>, i32 -> vector<4x256xf32>
    %81 = vector.extract_strided_slice %2 {offsets = [5, 0], sizes = [1, 256], strides = [1, 1]} : vector<9x256xf32> to vector<1x256xf32>
    %82 = vector.broadcast %81 : vector<1x256xf32> to vector<4x256xf32>
    %83 = arith.mulf %80, %82 : vector<4x256xf32>
    %c20_36 = arith.constant 20 : index
    %c0_37 = arith.constant 0 : index
    %84 = vector.load %arg8[%c20_36, %c0_37] : memref<36x256xf32, #tpu.memory_space<vmem>>, vector<4x256xf32>
    tpu.vector_store %arg8[%c20_36, %c0_37], %83 {strides = array<i32>} : memref<36x256xf32, #tpu.memory_space<vmem>>, vector<4x256xf32>,
    %c241_i32_38 = arith.constant 241 : i32
    %85 = tpu.dynamic_rotate %55 by %c241_i32_38 dim 1 : vector<4x256xf32>, i32 -> vector<4x256xf32>
    %86 = vector.extract_strided_slice %2 {offsets = [6, 0], sizes = [1, 256], strides = [1, 1]} : vector<9x256xf32> to vector<1x256xf32>
    %87 = vector.broadcast %86 : vector<1x256xf32> to vector<4x256xf32>
    %88 = arith.mulf %85, %87 : vector<4x256xf32>
    %c24_39 = arith.constant 24 : index
    %c0_40 = arith.constant 0 : index
    %89 = vector.load %arg8[%c24_39, %c0_40] : memref<36x256xf32, #tpu.memory_space<vmem>>, vector<4x256xf32>
    tpu.vector_store %arg8[%c24_39, %c0_40], %88 {strides = array<i32>} : memref<36x256xf32, #tpu.memory_space<vmem>>, vector<4x256xf32>,
    %c240_i32_41 = arith.constant 240 : i32
    %90 = tpu.dynamic_rotate %55 by %c240_i32_41 dim 1 : vector<4x256xf32>, i32 -> vector<4x256xf32>
    %91 = vector.extract_strided_slice %2 {offsets = [7, 0], sizes = [1, 256], strides = [1, 1]} : vector<9x256xf32> to vector<1x256xf32>
    %92 = vector.broadcast %91 : vector<1x256xf32> to vector<4x256xf32>
    %93 = arith.mulf %90, %92 : vector<4x256xf32>
    %c28_42 = arith.constant 28 : index
    %c0_43 = arith.constant 0 : index
    %94 = vector.load %arg8[%c28_42, %c0_43] : memref<36x256xf32, #tpu.memory_space<vmem>>, vector<4x256xf32>
    tpu.vector_store %arg8[%c28_42, %c0_43], %93 {strides = array<i32>} : memref<36x256xf32, #tpu.memory_space<vmem>>, vector<4x256xf32>,
    %c239_i32_44 = arith.constant 239 : i32
    %95 = tpu.dynamic_rotate %55 by %c239_i32_44 dim 1 : vector<4x256xf32>, i32 -> vector<4x256xf32>
    %96 = vector.extract_strided_slice %2 {offsets = [8, 0], sizes = [1, 256], strides = [1, 1]} : vector<9x256xf32> to vector<1x256xf32>
    %97 = vector.broadcast %96 : vector<1x256xf32> to vector<4x256xf32>
    %98 = arith.mulf %95, %97 : vector<4x256xf32>
    %c32_45 = arith.constant 32 : index
    %c0_46 = arith.constant 0 : index
    %99 = vector.load %arg8[%c32_45, %c0_46] : memref<36x256xf32, #tpu.memory_space<vmem>>, vector<4x256xf32>
    tpu.vector_store %arg8[%c32_45, %c0_46], %98 {strides = array<i32>} : memref<36x256xf32, #tpu.memory_space<vmem>>, vector<4x256xf32>,
    %c0_47 = arith.constant 0 : index
    %c0_48 = arith.constant 0 : index
    %100 = vector.load %arg8[%c0_47, %c0_48] : memref<36x256xf32, #tpu.memory_space<vmem>>, vector<36x256xf32>
    %101 = arith.truncf %100 : vector<36x256xf32> to vector<36x256xbf16>
    %c0_49 = arith.constant 0 : index
    %c0_50 = arith.constant 0 : index
    %102 = vector.load %arg4[%c0_49, %c0_50] : memref<4x36xbf16, #tpu.memory_space<vmem>>, vector<4x36xbf16>
    %cst_51 = arith.constant dense<0.000000e+00> : vector<4x256xf32>
    %103 = tpu.matmul %102, %101, %cst_51 {dimension_numbers = #tpu.dot_dimension_numbers<[1], [0], [0], [1], [0, 0, 1, 1], [], []>} : vector<4x36xbf16>, vector<36x256xbf16>, vector<4x256xf32> -> vector<4x256xf32>
    %c0_52 = arith.constant 0 : index
    %c0_53 = arith.constant 0 : index
    %104 = vector.load %arg5[%c0_52, %c0_53] : memref<4x1xf32, #tpu.memory_space<vmem>>, vector<4x1xf32>
    %105 = vector.broadcast %104 : vector<4x1xf32> to vector<4x256xf32>
    %106 = arith.addf %103, %105 : vector<4x256xf32>
    %107 = arith.addf %106, %1 : vector<4x256xf32>
    %cst_54 = arith.constant 0.000000e+00 : f32
    %108 = vector.broadcast %cst_54 : f32 to vector<4x256xf32>
    %109 = arith.maximumf %107, %108 : vector<4x256xf32>
    %c0_55 = arith.constant 0 : index
    %c0_56 = arith.constant 0 : index
    %c0_57 = arith.constant 0 : index
    %110 = vector.load %arg7[%c0_55, %c0_56, %c0_57] : memref<1x4x256xf32, #tpu.memory_space<vmem>>, vector<1x4x256xf32>
    %111 = vector.shape_cast %110 : vector<1x4x256xf32> to vector<4x256xf32>
    %112 = vector.shape_cast %109 : vector<4x256xf32> to vector<1x4x256xf32>
    tpu.vector_store %arg7[%c0_55, %c0_56, %c0_57], %112 {strides = array<i32>} : memref<1x4x256xf32, #tpu.memory_space<vmem>>, vector<1x4x256xf32>,
    return
  }
  func.func @transform_0(%arg0: i32) -> (i32, i32, i32) {
    %c0_i32 = arith.constant 0 : i32
    %c0_i32_0 = arith.constant 0 : i32
    %c0_i32_1 = arith.constant 0 : i32
    return %arg0, %c0_i32, %c0_i32_0 : i32, i32, i32
  }
  func.func @transform_1(%arg0: i32) -> (i32, i32) {
    %c0_i32 = arith.constant 0 : i32
    %c0_i32_0 = arith.constant 0 : i32
    %c0_i32_1 = arith.constant 0 : i32
    return %c0_i32, %c0_i32_0 : i32, i32
  }
  func.func @transform_2(%arg0: i32) -> (i32, i32) {
    %c0_i32 = arith.constant 0 : i32
    %c0_i32_0 = arith.constant 0 : i32
    %c0_i32_1 = arith.constant 0 : i32
    return %c0_i32, %c0_i32_0 : i32, i32
  }
  func.func @transform_3(%arg0: i32) -> (i32, i32) {
    %c0_i32 = arith.constant 0 : i32
    %c0_i32_0 = arith.constant 0 : i32
    %c0_i32_1 = arith.constant 0 : i32
    return %c0_i32, %c0_i32_0 : i32, i32
  }
  func.func @transform_4(%arg0: i32) -> (i32, i32) {
    %c0_i32 = arith.constant 0 : i32
    %c0_i32_0 = arith.constant 0 : i32
    %c0_i32_1 = arith.constant 0 : i32
    return %c0_i32, %c0_i32_0 : i32, i32
  }
  func.func @transform_5(%arg0: i32) -> (i32, i32) {
    %c0_i32 = arith.constant 0 : i32
    %c0_i32_0 = arith.constant 0 : i32
    %c0_i32_1 = arith.constant 0 : i32
    return %c0_i32, %c0_i32_0 : i32, i32
  }
  func.func @transform_6(%arg0: i32) -> (i32, i32, i32) {
    %c0_i32 = arith.constant 0 : i32
    %c0_i32_0 = arith.constant 0 : i32
    %c0_i32_1 = arith.constant 0 : i32
    return %arg0, %c0_i32, %c0_i32_0 : i32, i32, i32
  }
}

</mosaic_0001>

<llo_original>
// kernel: basic_block_forward.1
$region0: #{basic_block_forward.1}
  #allocation0 [shape = 'u32[]', space=smem, size = 0x4, offset = 0x4, fixed_abs, tag = 'smem constant byte address 0x4 - core index']
  #allocation1 [shape = 'u32[144,128]{1,0:T(1,128)}', space=vmem, size = 0x12000, scoped, tag = 'internal scratch']
  #allocation2 [shape = 'f32[36,256]{1,0:T(8,128)}', space=vmem, size = 0xa000, scoped, tag = 'scratch operand']
  %s0 = inlined_call_operand.vmem [shape: f32[2,4,256], index: 0, kind: input, shape index: {}]
  %s1 = inlined_call_operand.vmem [shape: bf16[4,36], index: 1, kind: input, shape index: {}]
  %s2 = inlined_call_operand.vmem [shape: f32[4,1], index: 2, kind: input, shape index: {}]
  %s3 = inlined_call_operand.vmem [shape: bf16[4,36], index: 3, kind: input, shape index: {}]
  %s4 = inlined_call_operand.vmem [shape: f32[4,1], index: 4, kind: input, shape index: {}]
  %s5 = inlined_call_operand.vmem [shape: f32[9,256], index: 5, kind: input, shape index: {}]
  %s6 = inlined_call_operand.vmem [shape: f32[2,4,256], index: 6, kind: output, shape index: {}]
  %s7 = sld [smem:[#allocation0]]
  $region57: #{basic_block_forward.1} parent=0
    _
  %s9 = ssub.s32 1, %s7
  %s10 = scalar_select 0, %s9, %s7
  loop: start=0, step=1, limit=4
  $region2: #{basic_block_forward.1} parent=0 // loop_pre_header
    _
  $region3: #{basic_block_forward.1} parent=0 // loop_header
    %s12 = sphi 0, %s16
    %p13 = scmp.ge.s32.totalorder %s12, 4
    %s22 = sphi 0, %s24
    %s25 = sphi 0, %s22
    %s26 = sphi 0, %s25
    %s42 = sphi 0, %s26
    %s46 = sphi 0, %s46
    %s48 = sphi 0, %s46
    %s49 = sphi 0, %s48
    %s63 = sphi 0, %s49
    %s67 = sphi 0, %s67
    %s69 = sphi 0, %s67
    %s70 = sphi 0, %s69
    %s84 = sphi 0, %s70
    %s88 = sphi 0, %s88
    %s90 = sphi 0, %s88
    %s91 = sphi 0, %s90
    %s105 = sphi 0, %s91
    %s109 = sphi 0, %s109
    %s111 = sphi 0, %s109
    %s112 = sphi 0, %s111
    %s126 = sphi 0, %s112
    %s130 = sphi 0, %s130
    %s132 = sphi 0, %s130
    %s133 = sphi 0, %s132
    %s147 = sphi 0, %s133
    %s153 = sphi 0, %s155
    %s156 = sphi 0, %s153
    %s157 = sphi 0, %s156
    %s173 = sphi 0, %s157
  $region4: #{basic_block_forward.1} parent=0 // loop_header_branch
    %15 = sbr.rel (%p13) target = $region8
  $region5: #{basic_block_forward.1} parent=0 // loop_body
    %s17 = ssub.s32 %s12, 1
    %s18 = ssub.s32 %s12, 2
    %s19 = sadd.s32 %s12, 1
    %s20 = ssub.s32 %s12, %s19
    %p21 = scmp.eq.s32.totalorder %s20, 0
    %s23 = sadd.s32 %s22, 1
    %s24 = scalar_select %p21, %s22, %s23
    %p27 = pneg %p21
    %p28 = scmp.eq.s32.totalorder %s12, 1
    %p29 = por %p27, %p28
    %p30 = scmp.ne.s32.totalorder %s22, %s25
    %p31 = scmp.eq.s32.totalorder %s12, 0
    %p32 = por %p30, %p31
    %p33 = scmp.ne.s32.totalorder %s22, %s25
    %p34 = scmp.eq.s32.totalorder %s17, 1
    %p35 = por %p33, %p34
    %p36 = scmp.ne.s32.totalorder %s25, %s26
    %p37 = scmp.eq.s32.totalorder %s17, 0
    %p38 = por %p36, %p37
    %p39 = scmp.ne.s32.totalorder %s25, %s26
    %p40 = scmp.eq.s32.totalorder %s18, 1
    %p41 = por %p39, %p40
    %p43 = scmp.ne.s32.totalorder %s26, %s42
    %p44 = scmp.eq.s32.totalorder %s18, 0
    %p45 = por %p43, %p44
    %s47 = sadd.s32 %s46, 1
    %p50 = scmp.eq.s32.totalorder %s12, 1
    %p51 = scmp.ne.s32.totalorder %s46, %s48
    %p52 = scmp.eq.s32.totalorder %s12, 0
    %p53 = por %p51, %p52
    %p54 = scmp.ne.s32.totalorder %s46, %s48
    %p55 = scmp.eq.s32.totalorder %s17, 1
    %p56 = por %p54, %p55
    %p57 = scmp.ne.s32.totalorder %s48, %s49
    %p58 = scmp.eq.s32.totalorder %s17, 0
    %p59 = por %p57, %p58
    %p60 = scmp.ne.s32.totalorder %s48, %s49
    %p61 = scmp.eq.s32.totalorder %s18, 1
    %p62 = por %p60, %p61
    %p64 = scmp.ne.s32.totalorder %s49, %s63
    %p65 = scmp.eq.s32.totalorder %s18, 0
    %p66 = por %p64, %p65
    %s68 = sadd.s32 %s67, 1
    %p71 = scmp.eq.s32.totalorder %s12, 1
    %p72 = scmp.ne.s32.totalorder %s67, %s69
    %p73 = scmp.eq.s32.totalorder %s12, 0
    %p74 = por %p72, %p73
    %p75 = scmp.ne.s32.totalorder %s67, %s69
    %p76 = scmp.eq.s32.totalorder %s17, 1
    %p77 = por %p75, %p76
    %p78 = scmp.ne.s32.totalorder %s69, %s70
    %p79 = scmp.eq.s32.totalorder %s17, 0
    %p80 = por %p78, %p79
    %p81 = scmp.ne.s32.totalorder %s69, %s70
    %p82 = scmp.eq.s32.totalorder %s18, 1
    %p83 = por %p81, %p82
    %p85 = scmp.ne.s32.totalorder %s70, %s84
    %p86 = scmp.eq.s32.totalorder %s18, 0
    %p87 = por %p85, %p86
    %s89 = sadd.s32 %s88, 1
    %p92 = scmp.eq.s32.totalorder %s12, 1
    %p93 = scmp.ne.s32.totalorder %s88, %s90
    %p94 = scmp.eq.s32.totalorder %s12, 0
    %p95 = por %p93, %p94
    %p96 = scmp.ne.s32.totalorder %s88, %s90
    %p97 = scmp.eq.s32.totalorder %s17, 1
    %p98 = por %p96, %p97
    %p99 = scmp.ne.s32.totalorder %s90, %s91
    %p100 = scmp.eq.s32.totalorder %s17, 0
    %p101 = por %p99, %p100
    %p102 = scmp.ne.s32.totalorder %s90, %s91
    %p103 = scmp.eq.s32.totalorder %s18, 1
    %p104 = por %p102, %p103
    %p106 = scmp.ne.s32.totalorder %s91, %s105
    %p107 = scmp.eq.s32.totalorder %s18, 0
    %p108 = por %p106, %p107
    %s110 = sadd.s32 %s109, 1
    %p113 = scmp.eq.s32.totalorder %s12, 1
    %p114 = scmp.ne.s32.totalorder %s109, %s111
    %p115 = scmp.eq.s32.totalorder %s12, 0
    %p116 = por %p114, %p115
    %p117 = scmp.ne.s32.totalorder %s109, %s111
    %p118 = scmp.eq.s32.totalorder %s17, 1
    %p119 = por %p117, %p118
    %p120 = scmp.ne.s32.totalorder %s111, %s112
    %p121 = scmp.eq.s32.totalorder %s17, 0
    %p122 = por %p120, %p121
    %p123 = scmp.ne.s32.totalorder %s111, %s112
    %p124 = scmp.eq.s32.totalorder %s18, 1
    %p125 = por %p123, %p124
    %p127 = scmp.ne.s32.totalorder %s112, %s126
    %p128 = scmp.eq.s32.totalorder %s18, 0
    %p129 = por %p127, %p128
    %s131 = sadd.s32 %s130, 1
    %p134 = scmp.eq.s32.totalorder %s12, 1
    %p135 = scmp.ne.s32.totalorder %s130, %s132
    %p136 = scmp.eq.s32.totalorder %s12, 0
    %p137 = por %p135, %p136
    %p138 = scmp.ne.s32.totalorder %s130, %s132
    %p139 = scmp.eq.s32.totalorder %s17, 1
    %p140 = por %p138, %p139
    %p141 = scmp.ne.s32.totalorder %s132, %s133
    %p142 = scmp.eq.s32.totalorder %s17, 0
    %p143 = por %p141, %p142
    %p144 = scmp.ne.s32.totalorder %s132, %s133
    %p145 = scmp.eq.s32.totalorder %s18, 1
    %p146 = por %p144, %p145
    %p148 = scmp.ne.s32.totalorder %s133, %s147
    %p149 = scmp.eq.s32.totalorder %s18, 0
    %p150 = por %p148, %p149
    %s151 = ssub.s32 %s12, %s19
    %p152 = scmp.eq.s32.totalorder %s151, 0
    %s154 = sadd.s32 %s153, 1
    %s155 = scalar_select %p152, %s153, %s154
    %p158 = pneg %p152
    %p159 = scmp.eq.s32.totalorder %s12, 1
    %p160 = por %p158, %p159
    %p161 = scmp.ne.s32.totalorder %s153, %s156
    %p162 = scmp.eq.s32.totalorder %s12, 0
    %p163 = por %p161, %p162
    %p164 = scmp.ne.s32.totalorder %s153, %s156
    %p165 = scmp.eq.s32.totalorder %s17, 1
    %p166 = por %p164, %p165
    %p167 = scmp.ne.s32.totalorder %s156, %s157
    %p168 = scmp.eq.s32.totalorder %s17, 0
    %p169 = por %p167, %p168
    %p170 = scmp.ne.s32.totalorder %s156, %s157
    %p171 = scmp.eq.s32.totalorder %s18, 1
    %p172 = por %p170, %p171
    %p174 = scmp.ne.s32.totalorder %s157, %s173
    %p175 = scmp.eq.s32.totalorder %s18, 0
    %p176 = por %p174, %p175
    %p177 = scmp.le.s32.totalorder 1, %s12
    %p178 = scmp.lt.s32.totalorder %s12, 3
    %p179 = pnand %p177, %p178
    %p180 = pneg %p179
    // Predicated region
    $region9: #{basic_block_forward.1} parent=5 // pred_check
      _
    $region10: #{basic_block_forward.1} parent=5 // pred_check_branch
      %182 = sbr.rel (%p179) target = $region12
    $region11: #{basic_block_forward.1} parent=5 // pred_region
      %s183 = ssub.s32 %s12, 1
      // Predicated region
      $region13: #{basic_block_forward.1} parent=11 // pred_check
        %p184 = pneg %p59
      $region14: #{basic_block_forward.1} parent=11 // pred_check_branch
        %186 = sbr.rel (%p184) target = $region16
      $region15: #{basic_block_forward.1} parent=11 // pred_region
        _
      $region16: #{basic_block_forward.1} parent=11 // pred_fallthru
        _
      // Predicated region
      $region17: #{basic_block_forward.1} parent=11 // pred_check
        %p187 = pneg %p80
      $region18: #{basic_block_forward.1} parent=11 // pred_check_branch
        %189 = sbr.rel (%p187) target = $region20
      $region19: #{basic_block_forward.1} parent=11 // pred_region
        _
      $region20: #{basic_block_forward.1} parent=11 // pred_fallthru
        _
      // Predicated region
      $region21: #{basic_block_forward.1} parent=11 // pred_check
        %p190 = pneg %p101
      $region22: #{basic_block_forward.1} parent=11 // pred_check_branch
        %192 = sbr.rel (%p190) target = $region24
      $region23: #{basic_block_forward.1} parent=11 // pred_region
        _
      $region24: #{basic_block_forward.1} parent=11 // pred_fallthru
        _
      // Predicated region
      $region25: #{basic_block_forward.1} parent=11 // pred_check
        %p193 = pneg %p122
      $region26: #{basic_block_forward.1} parent=11 // pred_check_branch
        %195 = sbr.rel (%p193) target = $region28
      $region27: #{basic_block_forward.1} parent=11 // pred_region
        _
      $region28: #{basic_block_forward.1} parent=11 // pred_fallthru
        _
      // Predicated region
      $region29: #{basic_block_forward.1} parent=11 // pred_check
        %p196 = pneg %p143
      $region30: #{basic_block_forward.1} parent=11 // pred_check_branch
        %198 = sbr.rel (%p196) target = $region32
      $region31: #{basic_block_forward.1} parent=11 // pred_region
        _
      $region32: #{basic_block_forward.1} parent=11 // pred_fallthru
        _
    $region12: #{basic_block_forward.1} parent=5 // pred_fallthru
      _
    %p199 = scmp.lt.s32.totalorder %s12, 2
    // Predicated region
    $region33: #{basic_block_forward.1} parent=5 // pred_check
      %p200 = pneg %p199
    $region34: #{basic_block_forward.1} parent=5 // pred_check_branch
      %202 = sbr.rel (%p200) target = $region36
    $region35: #{basic_block_forward.1} parent=5 // pred_region
      // Predicated region
      $region37: #{basic_block_forward.1} parent=35 // pred_check
        %p203 = pneg %p32
      $region38: #{basic_block_forward.1} parent=35 // pred_check_branch
        %205 = sbr.rel (%p203) target = $region40
      $region39: #{basic_block_forward.1} parent=35 // pred_region
        %p206 = scmp.lt.s32.totalorder %s12, 1
        %s207 = scalar_select %p206, %s12, 1
        %s208 = smul.addr %s207, 2
        %s209 = smul.addr %s208, 4
        %s210 = scalar_lea.vmem %s0, %s209
      $region40: #{basic_block_forward.1} parent=35 // pred_fallthru
        _
    $region36: #{basic_block_forward.1} parent=5 // pred_fallthru
      _
    %p211 = scmp.le.s32.totalorder 1, %s12
    %p212 = scmp.lt.s32.totalorder %s12, 3
    %p213 = pnand %p211, %p212
    %p214 = pneg %p213
    // Predicated region
    $region41: #{basic_block_forward.1} parent=5 // pred_check
      _
    $region42: #{basic_block_forward.1} parent=5 // pred_check_branch
      %216 = sbr.rel (%p213) target = $region44
    $region43: #{basic_block_forward.1} parent=5 // pred_region
      %s217 = ssub.s32 %s12, 1
      %p218 = scmp.lt.s32.totalorder %s17, 1
      %s219 = scalar_select %p218, %s17, 1
      %s220 = smul.addr %s219, 2
      %s221 = smul.addr %s220, 4
      %s222 = scalar_lea.vmem %s0, %s221
      %p223 = pneg %p38
      %p224 = pneg %p35
      %p225 = pneg %p59
      %p226 = pneg %p56
      %p227 = pneg %p80
      %p228 = pneg %p77
      %p229 = pneg %p101
      %p230 = pneg %p98
      %p231 = pneg %p122
      %p232 = pneg %p119
      %p233 = pneg %p143
      %p234 = pneg %p140
      %p235 = pneg %p169
      %p236 = pneg %p166
      %p237 = scmp.lt.s32.totalorder %s17, 1
      %s238 = scalar_select %p237, %s17, 1
      %s239 = smul.addr %s238, 2
      %s240 = smul.addr %s239, 4
      %s241 = scalar_lea.vmem %s6, %s240
      %p242 = scmp.lt.s32.totalorder %s17, 1
      %s243 = scalar_select %p242, %s17, 1
      %s244 = smul.addr %s243, 2
      %s245 = smul.addr %s244, 4
      %s246 = scalar_lea.vmem %s0, %s245
      %p247 = scmp.lt.s32.totalorder %s17, 1
      %s248 = scalar_select %p247, %s17, 1
      %s249 = smul.addr %s248, 2
      %s250 = smul.addr %s249, 4
      %s251 = scalar_lea.vmem %s6, %s250
      %v253 = vld [vmem:[%s246] sm:$0xff]
      %v254 = vld [vmem:[%s5] sm:$0xff]
      %v255 = vld [vmem:[%s5 + $0x8] sm:$0xff]
      %v256 = vld [vmem:[%s5 + $0x10] sm:$0x1]
      %v257 = vld [vmem:[%s5 + $0x18] sm:$0x1]
      %v259 = vcombine.high %v253, %v253
      %261 = vrot.lane.b32.xlu0 %v253, 17
      %v262 = vpop.permute.xlu0 %261
      %263 = vrot.lane.b32.xlu0 %v259, 17
      %v264 = vpop.permute.xlu0 %263
      %v265 = vlaneseq
      %v266 = vand.u32 %v265, 127
      %vm267 = vcmp.lt.s32.totalorder %v266, 17
      %v268 = vsel %vm267, %v262, %v264
      %v269 = vsel %vm267, %v264, %v262
      %v270 = vlaneseq
      %v271 = vshrl.u32 %v270, 7
      %v272 = vsub.s32 0, %v271
      %v273 = vrot.slane %v254, %v272
      %v274 = vlaneseq
      %v275 = vshrl.u32 %v274, 7
      %v276 = vsub.s32 0, %v275
      %v277 = vrot.slane %v255, %v276
      %v278 = vmul.f32 %v269, %v273
      %v279 = vmul.f32 %v268, %v277
      %280 = vst [vmem:[#allocation2] sm:$0xf] %v278
      %281 = vst [vmem:[#allocation2 + $0x8] sm:$0xf] %v279
      %282 = vrot.lane.b32.xlu0 %v253, 16
      %v283 = vpop.permute.xlu0 %282
      %284 = vrot.lane.b32.xlu0 %v259, 16
      %v285 = vpop.permute.xlu0 %284
      %vm286 = vcmp.lt.s32.totalorder %v266, 16
      %v287 = vsel %vm286, %v283, %v285
      %v288 = vsel %vm286, %v285, %v283
      %v289 = vlaneseq
      %v290 = vshrl.u32 %v289, 7
      %v291 = vsub.s32 1, %v290
      %v292 = vrot.slane %v254, %v291
      %v293 = vlaneseq
      %v294 = vshrl.u32 %v293, 7
      %v295 = vsub.s32 1, %v294
      %v296 = vrot.slane %v255, %v295
      %v297 = vmul.f32 %v288, %v292
      %v298 = vmul.f32 %v287, %v296
      %v301 = vrot.slane %v297, 4
      %v302 = vrot.slane %v298, 4
      %305 = vst [vmem:[#allocation2] sm:$0xf0] %v301
      %306 = vst [vmem:[#allocation2 + $0x8] sm:$0xf0] %v302
      %307 = vrot.lane.b32.xlu0 %v253, 15
      %v308 = vpop.permute.xlu0 %307
      %309 = vrot.lane.b32.xlu0 %v259, 15
      %v310 = vpop.permute.xlu0 %309
      %vm311 = vcmp.lt.s32.totalorder %v266, 15
      %v312 = vsel %vm311, %v308, %v310
      %v313 = vsel %vm311, %v310, %v308
      %v314 = vlaneseq
      %v315 = vshrl.u32 %v314, 7
      %v316 = vsub.s32 2, %v315
      %v317 = vrot.slane %v254, %v316
      %v318 = vlaneseq
      %v319 = vshrl.u32 %v318, 7
      %v320 = vsub.s32 2, %v319
      %v321 = vrot.slane %v255, %v320
      %v322 = vmul.f32 %v313, %v317
      %v323 = vmul.f32 %v312, %v321
      %324 = vst [vmem:[#allocation2 + $0x10] sm:$0xf] %v322
      %325 = vst [vmem:[#allocation2 + $0x18] sm:$0xf] %v323
      %326 = vrot.lane.b32.xlu0 %v253, 1
      %v327 = vpop.permute.xlu0 %326
      %328 = vrot.lane.b32.xlu0 %v259, 1
      %v329 = vpop.permute.xlu0 %328
      %vm330 = vcmp.lt.s32.totalorder %v266, 1
      %v331 = vsel %vm330, %v327, %v329
      %v332 = vsel %vm330, %v329, %v327
      %v333 = vlaneseq
      %v334 = vshrl.u32 %v333, 7
      %v335 = vsub.s32 3, %v334
      %v336 = vrot.slane %v254, %v335
      %v337 = vlaneseq
      %v338 = vshrl.u32 %v337, 7
      %v339 = vsub.s32 3, %v338
      %v340 = vrot.slane %v255, %v339
      %v341 = vmul.f32 %v332, %v336
      %v342 = vmul.f32 %v331, %v340
      %v345 = vrot.slane %v341, 4
      %v346 = vrot.slane %v342, 4
      %349 = vst [vmem:[#allocation2 + $0x10] sm:$0xf0] %v345
      %350 = vst [vmem:[#allocation2 + $0x18] sm:$0xf0] %v346
      %v351 = vlaneseq
      %v352 = vshrl.u32 %v351, 7
      %v353 = vsub.s32 4, %v352
      %v354 = vrot.slane %v254, %v353
      %v355 = vlaneseq
      %v356 = vshrl.u32 %v355, 7
      %v357 = vsub.s32 4, %v356
      %v358 = vrot.slane %v255, %v357
      %v361 = vcombine.low %v354, %v358
      %v363 = vmul.f32 %v253, %v361
      %v365 = vcombine.high %v363, %v363
      %367 = vst [vmem:[#allocation2 + $0x20] sm:$0xf] %v363
      %368 = vst [vmem:[#allocation2 + $0x28] sm:$0xf] %v365
      %369 = vrot.lane.b32.xlu0 %v253, 127
      %v370 = vpop.permute.xlu0 %369
      %371 = vrot.lane.b32.xlu0 %v259, 127
      %v372 = vpop.permute.xlu0 %371
      %vm373 = vcmp.lt.s32.totalorder %v266, 127
      %v374 = vsel %vm373, %v370, %v372
      %v375 = vsel %vm373, %v372, %v370
      %v376 = vlaneseq
      %v377 = vshrl.u32 %v376, 7
      %v378 = vsub.s32 5, %v377
      %v379 = vrot.slane %v254, %v378
      %v380 = vlaneseq
      %v381 = vshrl.u32 %v380, 7
      %v382 = vsub.s32 5, %v381
      %v383 = vrot.slane %v255, %v382
      %v384 = vmul.f32 %v374, %v379
      %v385 = vmul.f32 %v375, %v383
      %v388 = vrot.slane %v384, 4
      %v389 = vrot.slane %v385, 4
      %392 = vst [vmem:[#allocation2 + $0x20] sm:$0xf0] %v388
      %393 = vst [vmem:[#allocation2 + $0x28] sm:$0xf0] %v389
      %394 = vrot.lane.b32.xlu0 %v253, 113
      %v395 = vpop.permute.xlu0 %394
      %396 = vrot.lane.b32.xlu0 %v259, 113
      %v397 = vpop.permute.xlu0 %396
      %vm398 = vcmp.lt.s32.totalorder %v266, 113
      %v399 = vsel %vm398, %v395, %v397
      %v400 = vsel %vm398, %v397, %v395
      %v401 = vlaneseq
      %v402 = vshrl.u32 %v401, 7
      %v403 = vsub.s32 6, %v402
      %v404 = vrot.slane %v254, %v403
      %v405 = vlaneseq
      %v406 = vshrl.u32 %v405, 7
      %v407 = vsub.s32 6, %v406
      %v408 = vrot.slane %v255, %v407
      %v409 = vmul.f32 %v399, %v404
      %v410 = vmul.f32 %v400, %v408
      %411 = vst [vmem:[#allocation2 + $0x30] sm:$0xf] %v409
      %412 = vst [vmem:[#allocation2 + $0x38] sm:$0xf] %v410
      %413 = vrot.lane.b32.xlu0 %v253, 112
      %v414 = vpop.permute.xlu0 %413
      %415 = vrot.lane.b32.xlu0 %v259, 112
      %v416 = vpop.permute.xlu0 %415
      %vm417 = vcmp.lt.s32.totalorder %v266, 112
      %v418 = vsel %vm417, %v414, %v416
      %v419 = vsel %vm417, %v416, %v414
      %v420 = vlaneseq
      %v421 = vshrl.u32 %v420, 7
      %v422 = vsub.s32 7, %v421
      %v423 = vrot.slane %v254, %v422
      %v424 = vlaneseq
      %v425 = vshrl.u32 %v424, 7
      %v426 = vsub.s32 7, %v425
      %v427 = vrot.slane %v255, %v426
      %v428 = vmul.f32 %v418, %v423
      %v429 = vmul.f32 %v419, %v427
      %v432 = vrot.slane %v428, 4
      %v433 = vrot.slane %v429, 4
      %436 = vst [vmem:[#allocation2 + $0x30] sm:$0xf0] %v432
      %437 = vst [vmem:[#allocation2 + $0x38] sm:$0xf0] %v433
      %438 = vrot.lane.b32.xlu0 %v253, 111
      %v439 = vpop.permute.xlu0 %438
      %440 = vrot.lane.b32.xlu0 %v259, 111
      %v441 = vpop.permute.xlu0 %440
      %vm442 = vcmp.lt.s32.totalorder %v266, 111
      %v443 = vsel %vm442, %v439, %v441
      %v444 = vsel %vm442, %v441, %v439
      %v445 = vlaneseq
      %v446 = vshrl.u32 %v445, 7
      %v447 = vsub.s32 0, %v446
      %v448 = vrot.slane %v256, %v447
      %v449 = vlaneseq
      %v450 = vshrl.u32 %v449, 7
      %v451 = vsub.s32 0, %v450
      %v452 = vrot.slane %v257, %v451
      %v453 = vmul.f32 %v443, %v448
      %v454 = vmul.f32 %v444, %v452
      %455 = vst [vmem:[#allocation2 + $0x40] sm:$0xf] %v453
      %456 = vst [vmem:[#allocation2 + $0x48] sm:$0xf] %v454
      %v457 = vld [vmem:[#allocation2] sm:$0xff]
      %v458 = vld [vmem:[#allocation2 + $0x8] sm:$0xff]
      %v459 = vld [vmem:[#allocation2 + $0x10] sm:$0xff]
      %v460 = vld [vmem:[#allocation2 + $0x18] sm:$0xff]
      %v461 = vld [vmem:[#allocation2 + $0x20] sm:$0xff]
      %v462 = vld [vmem:[#allocation2 + $0x28] sm:$0xff]
      %v463 = vld [vmem:[#allocation2 + $0x30] sm:$0xff]
      %v464 = vld [vmem:[#allocation2 + $0x38] sm:$0xff]
      %v465 = vld [vmem:[#allocation2 + $0x40] sm:$0xf]
      %v466 = vld [vmem:[#allocation2 + $0x48] sm:$0xf]
      %v467 = vpack.c.bf16 %v459, %v457
      %v468 = vpack.c.bf16 %v460, %v458
      %v469 = vpack.c.bf16 %v463, %v461
      %v470 = vpack.c.bf16 %v464, %v462
      %v471 = vpack.c.bf16 %v465, %v465
      %v472 = vpack.c.bf16 %v466, %v466
      %v473 = vld [vmem:[%s1] sm:$0x3]
      %v474 = vld [vmem:[%s2] sm:$0xf]
      %476 = vset.pattern.permute.xlu0 0
      %477 = vperm.xlu0 %476, %v474
      %v478 = vpop.permute.xlu0 %477
      %vm480 = vcmask 293888
      %v482 = vsel %vm480, %v473, 0
      %vm484 = vcmask 1041408
      %v486 = vsel %vm484, %v471, 0
      %v489 = vsel %vm484, %v472, 0
      %491 = vmatprep.subr.bf16.mxu0 %v468
      %492 = vmatpush1.bf16.msra.mxu0 %v467
      %493 = vmatprep.subr.bf16.mxu0 %v470
      %494 = vmatpush1.bf16.msra.mxu0 %v469
      %495 = vmatprep.subr.bf16.mxu0 %v489
      %496 = vmatpush1.bf16.msra.mxu0 %v486
      %497 = vmatprep.subr.bf16.mxu0 0
      %498 = vmatpush1.bf16.msra.mxu0 0
      %499 = vmatprep.subr.bf16.mxu0 0
      %500 = vmatpush1.bf16.msra.mxu0 0
      %501 = vmatprep.subr.bf16.mxu0 0
      %502 = vmatpush1.bf16.msra.mxu0 0
      %503 = vmatprep.subr.bf16.mxu0 0
      %504 = vmatpush1.bf16.msra.mxu0 0
      %505 = vmatprep.subr.bf16.mxu0 0
      %506 = vmatpush1.bf16.msra.mxu0 0
      %507 = vmatprep.subr.bf16.mxu0 0
      %508 = vmatpush1.bf16.msra.mxu0 0
      %509 = vmatprep.subr.bf16.mxu0 0
      %510 = vmatpush1.bf16.msra.mxu0 0
      %511 = vmatprep.subr.bf16.mxu0 0
      %512 = vmatpush1.bf16.msra.mxu0 0
      %513 = vmatprep.subr.bf16.mxu0 0
      %514 = vmatpush1.bf16.msra.mxu0 0
      %515 = vmatprep.subr.bf16.mxu0 0
      %516 = vmatpush1.bf16.msra.mxu0 0
      %517 = vmatprep.subr.bf16.mxu0 0
      %518 = vmatpush1.bf16.msra.mxu0 0
      %519 = vmatprep.subr.bf16.mxu0 0
      %520 = vmatpush1.bf16.msra.mxu0 0
      %521 = vmatprep.subr.bf16.mxu0 0
      %522 = vmatpush1.bf16.msra.mxu0 0
      %523 = vmatprep.mubr.bf16.mxu0 0
      %524 = vmatmul.mubr.bf16.gmra.mrb[0].mxu0 %v482
      %v525 = vpop.f32.mrb[0].mxu0
      %v526 = vadd.f32 %v478, %v525
      %v527 = vpop.f32.mrb[0].mxu0
      %v528 = vadd.f32 %v478, %v527
      %v529 = vpop.f32.mrb[0].mxu0
      %v530 = vpop.f32.mrb[0].mxu0
      %531 = vdwg.mxu0
      %v532 = vmax.f32 %v526, 0.0
      %v533 = vmax.f32 %v528, 0.0
      %534 = vrot.lane.b32.xlu0 %v532, 17
      %v535 = vpop.permute.xlu0 %534
      %536 = vrot.lane.b32.xlu0 %v533, 17
      %v537 = vpop.permute.xlu0 %536
      %v538 = vsel %vm267, %v535, %v537
      %v539 = vsel %vm267, %v537, %v535
      %v540 = vmul.f32 %v539, %v273
      %v541 = vmul.f32 %v538, %v277
      %542 = vst [vmem:[#allocation2] sm:$0xf] %v540
      %543 = vst [vmem:[#allocation2 + $0x8] sm:$0xf] %v541
      %544 = vrot.lane.b32.xlu0 %v532, 16
      %v545 = vpop.permute.xlu0 %544
      %546 = vrot.lane.b32.xlu0 %v533, 16
      %v547 = vpop.permute.xlu0 %546
      %v548 = vsel %vm286, %v545, %v547
      %v549 = vsel %vm286, %v547, %v545
      %v550 = vmul.f32 %v549, %v292
      %v551 = vmul.f32 %v548, %v296
      %v554 = vrot.slane %v550, 4
      %v555 = vrot.slane %v551, 4
      %558 = vst [vmem:[#allocation2] sm:$0xf0] %v554
      %559 = vst [vmem:[#allocation2 + $0x8] sm:$0xf0] %v555
      %560 = vrot.lane.b32.xlu0 %v532, 15
      %v561 = vpop.permute.xlu0 %560
      %562 = vrot.lane.b32.xlu0 %v533, 15
      %v563 = vpop.permute.xlu0 %562
      %v564 = vsel %vm311, %v561, %v563
      %v565 = vsel %vm311, %v563, %v561
      %v566 = vmul.f32 %v565, %v317
      %v567 = vmul.f32 %v564, %v321
      %568 = vst [vmem:[#allocation2 + $0x10] sm:$0xf] %v566
      %569 = vst [vmem:[#allocation2 + $0x18] sm:$0xf] %v567
      %570 = vrot.lane.b32.xlu0 %v532, 1
      %v571 = vpop.permute.xlu0 %570
      %572 = vrot.lane.b32.xlu0 %v533, 1
      %v573 = vpop.permute.xlu0 %572
      %v574 = vsel %vm330, %v571, %v573
      %v575 = vsel %vm330, %v573, %v571
      %v576 = vmul.f32 %v575, %v336
      %v577 = vmul.f32 %v574, %v340
      %v580 = vrot.slane %v576, 4
      %v581 = vrot.slane %v577, 4
      %584 = vst [vmem:[#allocation2 + $0x10] sm:$0xf0] %v580
      %585 = vst [vmem:[#allocation2 + $0x18] sm:$0xf0] %v581
      %v586 = vmul.f32 %v532, %v354
      %v587 = vmul.f32 %v533, %v358
      %588 = vst [vmem:[#allocation2 + $0x20] sm:$0xf] %v586
      %589 = vst [vmem:[#allocation2 + $0x28] sm:$0xf] %v587
      %590 = vrot.lane.b32.xlu0 %v532, 127
      %v591 = vpop.permute.xlu0 %590
      %592 = vrot.lane.b32.xlu0 %v533, 127
      %v593 = vpop.permute.xlu0 %592
      %v594 = vsel %vm373, %v591, %v593
      %v595 = vsel %vm373, %v593, %v591
      %v596 = vmul.f32 %v594, %v379
      %v597 = vmul.f32 %v595, %v383
      %v600 = vrot.slane %v596, 4
      %v601 = vrot.slane %v597, 4
      %604 = vst [vmem:[#allocation2 + $0x20] sm:$0xf0] %v600
      %605 = vst [vmem:[#allocation2 + $0x28] sm:$0xf0] %v601
      %606 = vrot.lane.b32.xlu0 %v532, 113
      %v607 = vpop.permute.xlu0 %606
      %608 = vrot.lane.b32.xlu0 %v533, 113
      %v609 = vpop.permute.xlu0 %608
      %v610 = vsel %vm398, %v607, %v609
      %v611 = vsel %vm398, %v609, %v607
      %v612 = vmul.f32 %v610, %v404
      %v613 = vmul.f32 %v611, %v408
      %614 = vst [vmem:[#allocation2 + $0x30] sm:$0xf] %v612
      %615 = vst [vmem:[#allocation2 + $0x38] sm:$0xf] %v613
      %616 = vrot.lane.b32.xlu0 %v532, 112
      %v617 = vpop.permute.xlu0 %616
      %618 = vrot.lane.b32.xlu0 %v533, 112
      %v619 = vpop.permute.xlu0 %618
      %v620 = vsel %vm417, %v617, %v619
      %v621 = vsel %vm417, %v619, %v617
      %v622 = vmul.f32 %v620, %v423
      %v623 = vmul.f32 %v621, %v427
      %v626 = vrot.slane %v622, 4
      %v627 = vrot.slane %v623, 4
      %630 = vst [vmem:[#allocation2 + $0x30] sm:$0xf0] %v626
      %631 = vst [vmem:[#allocation2 + $0x38] sm:$0xf0] %v627
      %632 = vrot.lane.b32.xlu0 %v532, 111
      %v633 = vpop.permute.xlu0 %632
      %634 = vrot.lane.b32.xlu0 %v533, 111
      %v635 = vpop.permute.xlu0 %634
      %v636 = vsel %vm442, %v633, %v635
      %v637 = vsel %vm442, %v635, %v633
      %v638 = vmul.f32 %v636, %v448
      %v639 = vmul.f32 %v637, %v452
      %640 = vst [vmem:[#allocation2 + $0x40] sm:$0xf] %v638
      %641 = vst [vmem:[#allocation2 + $0x48] sm:$0xf] %v639
      %v642 = vld [vmem:[#allocation2] sm:$0xff]
      %v643 = vld [vmem:[#allocation2 + $0x8] sm:$0xff]
      %v644 = vld [vmem:[#allocation2 + $0x10] sm:$0xff]
      %v645 = vld [vmem:[#allocation2 + $0x18] sm:$0xff]
      %v646 = vld [vmem:[#allocation2 + $0x20] sm:$0xff]
      %v647 = vld [vmem:[#allocation2 + $0x28] sm:$0xff]
      %v648 = vld [vmem:[#allocation2 + $0x30] sm:$0xff]
      %v649 = vld [vmem:[#allocation2 + $0x38] sm:$0xff]
      %v650 = vld [vmem:[#allocation2 + $0x40] sm:$0xf]
      %v651 = vld [vmem:[#allocation2 + $0x48] sm:$0xf]
      %v652 = vpack.c.bf16 %v644, %v642
      %v653 = vpack.c.bf16 %v645, %v643
      %v654 = vpack.c.bf16 %v648, %v646
      %v655 = vpack.c.bf16 %v649, %v647
      %v656 = vpack.c.bf16 %v650, %v650
      %v657 = vpack.c.bf16 %v651, %v651
      %v658 = vld [vmem:[%s3] sm:$0x3]
      %v659 = vld [vmem:[%s4] sm:$0xf]
      %661 = vset.pattern.permute.xlu0 0
      %662 = vperm.xlu0 %661, %v659
      %v663 = vpop.permute.xlu0 %662
      %v666 = vsel %vm480, %v658, 0
      %v669 = vsel %vm484, %v656, 0
      %v672 = vsel %vm484, %v657, 0
      %674 = vmatprep.subr.bf16.mxu0 %v653
      %675 = vmatpush1.bf16.msra.mxu0 %v652
      %676 = vmatprep.subr.bf16.mxu0 %v655
      %677 = vmatpush1.bf16.msra.mxu0 %v654
      %678 = vmatprep.subr.bf16.mxu0 %v672
      %679 = vmatpush1.bf16.msra.mxu0 %v669
      %680 = vmatprep.subr.bf16.mxu0 0
      %681 = vmatpush1.bf16.msra.mxu0 0
      %682 = vmatprep.subr.bf16.mxu0 0
      %683 = vmatpush1.bf16.msra.mxu0 0
      %684 = vmatprep.subr.bf16.mxu0 0
      %685 = vmatpush1.bf16.msra.mxu0 0
      %686 = vmatprep.subr.bf16.mxu0 0
      %687 = vmatpush1.bf16.msra.mxu0 0
      %688 = vmatprep.subr.bf16.mxu0 0
      %689 = vmatpush1.bf16.msra.mxu0 0
      %690 = vmatprep.subr.bf16.mxu0 0
      %691 = vmatpush1.bf16.msra.mxu0 0
      %692 = vmatprep.subr.bf16.mxu0 0
      %693 = vmatpush1.bf16.msra.mxu0 0
      %694 = vmatprep.subr.bf16.mxu0 0
      %695 = vmatpush1.bf16.msra.mxu0 0
      %696 = vmatprep.subr.bf16.mxu0 0
      %697 = vmatpush1.bf16.msra.mxu0 0
      %698 = vmatprep.subr.bf16.mxu0 0
      %699 = vmatpush1.bf16.msra.mxu0 0
      %700 = vmatprep.subr.bf16.mxu0 0
      %701 = vmatpush1.bf16.msra.mxu0 0
      %702 = vmatprep.subr.bf16.mxu0 0
      %703 = vmatpush1.bf16.msra.mxu0 0
      %704 = vmatprep.subr.bf16.mxu0 0
      %705 = vmatpush1.bf16.msra.mxu0 0
      %706 = vmatprep.mubr.bf16.mxu0 0
      %707 = vmatmul.mubr.bf16.gmra.mrb[0].mxu0 %v666
      %v708 = vpop.f32.mrb[0].mxu0
      %v709 = vadd.f32 %v663, %v708
      %v710 = vpop.f32.mrb[0].mxu0
      %v711 = vadd.f32 %v663, %v710
      %v712 = vpop.f32.mrb[0].mxu0
      %v713 = vpop.f32.mrb[0].mxu0
      %714 = vdwg.mxu0
      %v715 = vadd.f32 %v709, %v253
      %v716 = vadd.f32 %v711, %v259
      %v717 = vmax.f32 %v715, 0.0
      %v718 = vmax.f32 %v716, 0.0
      %v721 = vcombine.low %v717, %v718
      %723 = vst [vmem:[%s251] sm:$0xff] %v721
      %p724 = scmp.lt.s32.totalorder %s17, 1
      %s725 = scalar_select %p724, %s17, 1
      %s726 = smul.addr %s725, 2
      %s727 = smul.addr %s726, 4
      %s728 = scalar_lea.vmem %s6, %s727
      // Predicated region
      $region45: #{basic_block_forward.1} parent=43 // pred_check
        %p729 = pneg %p166
      $region46: #{basic_block_forward.1} parent=43 // pred_check_branch
        %731 = sbr.rel (%p729) target = $region48
      $region47: #{basic_block_forward.1} parent=43 // pred_region
        _
      $region48: #{basic_block_forward.1} parent=43 // pred_fallthru
        _
    $region44: #{basic_block_forward.1} parent=5 // pred_fallthru
      _
    %p732 = scmp.le.s32.totalorder 2, %s12
    // Predicated region
    $region49: #{basic_block_forward.1} parent=5 // pred_check
      %p733 = pneg %p732
    $region50: #{basic_block_forward.1} parent=5 // pred_check_branch
      %735 = sbr.rel (%p733) target = $region52
    $region51: #{basic_block_forward.1} parent=5 // pred_region
      %s736 = ssub.s32 %s12, 2
      // Predicated region
      $region53: #{basic_block_forward.1} parent=51 // pred_check
        %p737 = pneg %p172
      $region54: #{basic_block_forward.1} parent=51 // pred_check_branch
        %739 = sbr.rel (%p737) target = $region56
      $region55: #{basic_block_forward.1} parent=51 // pred_region
        %p740 = scmp.lt.s32.totalorder %s18, 1
        %s741 = scalar_select %p740, %s18, 1
        %s742 = smul.addr %s741, 2
        %s743 = smul.addr %s742, 4
        %s744 = scalar_lea.vmem %s6, %s743
      $region56: #{basic_block_forward.1} parent=51 // pred_fallthru
        _
    $region52: #{basic_block_forward.1} parent=5 // pred_fallthru
      _
  $region6: #{basic_block_forward.1} parent=0 // loop_footer
    %s16 = sadd.s32 1, %s12
  $region7: #{basic_block_forward.1} parent=0 // loop_footer_branch
    %11 = sbr.rel target = $region3
  $region8: #{basic_block_forward.1} parent=0 // loop_exit
    _

</llo_original>
